<compile_context>
chip_gen: v6e
topology: v6e:2x2x1
jax: 0.10.0
libtpu: 0.0.40
codegen_flags: <defaults>
</compile_context>

<pallas_src>
from functools import partial

import jax
import jax.numpy as jnp
from jax import lax
from jax.experimental import pallas as pl
from jax.experimental.pallas import tpu as pltpu


def _pick_tile(n, target):
    """Largest tile <= target that divides n (falls back to n)."""
    if n <= target:
        return n
    t = target
    while t >= 8:
        if n % t == 0:
            return t
        t //= 2
    return n


# ---------------------------------------------------------------------------
# Kernel 1: input projections  y = x @ W_t + b  for the packed {q, k, v} axis.
# Grid = (3, B, S // TS); each step is a full-E-wide bf16 MXU GEMM, f32 accumulate.
# ---------------------------------------------------------------------------
def _proj_kernel(x_ref, w_ref, b_ref, o_ref):
    # x_ref: (1, 1, TS, E) bf16 | w_ref: (1, E, E) bf16 (pre-transposed) | b_ref: (1, 1, E) f32
    y = jnp.dot(x_ref[0, 0], w_ref[0], preferred_element_type=jnp.float32)
    y = y + b_ref[0]                       # broadcast (1, E) -> (TS, E)
    o_ref[0, 0] = y.astype(o_ref.dtype)    # bf16 intermediate (halves HBM traffic)


# ---------------------------------------------------------------------------
# Kernel 2: per-head attention + fused output projection.
# Grid = (B, S // TQ, H); the head axis is "arbitrary" and the (TQ, E) output
# accumulates ctx_h @ Wo_h (+ bias) in an f32 VMEM scratch.
# ---------------------------------------------------------------------------
def _attn_kernel(q_ref, k_ref, v_ref, wo_ref, bo_ref, o_ref, acc_ref, *, scale):
    h = pl.program_id(2)

    @pl.when(h == 0)
    def _init():
        # Start the accumulator at the output-projection bias.
        acc_ref[...] = jnp.zeros_like(acc_ref) + bo_ref[...]

    q = q_ref[0, 0]            # (TQ, D) bf16
    k = k_ref[0, 0]            # (S,  D) bf16
    v = v_ref[0, 0]            # (S,  D) bf16

    # Scores: q @ k^T without an explicit transpose (NT dot_general feeds the MXU directly).
    s = lax.dot_general(q, k, (((1,), (1,)), ((), ())),
                        preferred_element_type=jnp.float32) * scale       # (TQ, S) f32

    # Softmax in f32; normalization via EUP approximate reciprocal (frees VALU slots).
    m = jnp.max(s, axis=-1, keepdims=True)
    p = jnp.exp(s - m)
    denom = jnp.sum(p, axis=-1, keepdims=True)
    p = p * pl.reciprocal(denom, approx=True)

    ctx = jnp.dot(p.astype(v.dtype), v, preferred_element_type=jnp.float32)   # (TQ, D) f32

    # Fused output projection for this head, accumulated across heads.
    acc_ref[...] += jnp.dot(ctx.astype(wo_ref.dtype), wo_ref[0],
                            preferred_element_type=jnp.float32)               # (TQ, E) f32

    @pl.when(h == pl.num_programs(2) - 1)
    def _finalize():
        o_ref[0] = acc_ref[...].astype(o_ref.dtype)


def multi_head_attention(query, key, value, params, num_heads, attn_mask=None):
    """query/key/value: (B, S, E) float32. params: (wq, wk, wv, wo, bq, bk, bv, bo)."""
    if attn_mask is not None:
        raise NotImplementedError("attn_mask not supported")  # TODO(synk)
    assert query.shape == key.shape == value.shape, "q/k/v must share (B, S, E)"
    B, S, E = query.shape
    H = num_heads
    assert E % H == 0, "embed_dim must be divisible by num_heads"
    D = E // H
    wq, wk, wv, wo, bq, bk, bv, bo = params

    # ---- host-side packing (free): pre-transposed weights, packed q/k/v, bf16 casts ----
    w_in_t = jnp.stack([wq.T, wk.T, wv.T]).astype(jnp.bfloat16)   # (3, E, E)
    b_in = jnp.stack([bq, bk, bv]).astype(jnp.float32)            # (3, 1, E)
    x_in = jnp.stack([query, key, value]).astype(jnp.bfloat16)    # (3, B, S, E)
    wo_ht = wo.T.reshape(H, D, E).astype(jnp.bfloat16)            # (H, D, E) head-major rows of Wo^T
    bo_f32 = bo.astype(jnp.float32)                               # (1, E)

    # ---- kernel 1: q/k/v projections (one pallas_call, batched over the {q,k,v} axis) ----
    TS = _pick_tile(S, 256)
    proj = pl.pallas_call(
        _proj_kernel,
        out_shape=jax.ShapeDtypeStruct((3, B, S, E), jnp.bfloat16),
        grid_spec=pltpu.PrefetchScalarGridSpec(
            num_scalar_prefetch=0,
            grid=(3, B, S // TS),
            in_specs=[
                pl.BlockSpec((1, 1, TS, E), lambda p, b, s: (p, b, s, 0)),
                pl.BlockSpec((1, E, E), lambda p, b, s: (p, 0, 0)),
                pl.BlockSpec((1, 1, E), lambda p, b, s: (p, 0, 0)),
            ],
            out_specs=pl.BlockSpec((1, 1, TS, E), lambda p, b, s: (p, b, s, 0)),
        ),
        compiler_params=pltpu.CompilerParams(
            dimension_semantics=("parallel", "parallel", "parallel")),
    )(x_in, w_in_t, b_in)

    # ---- wrapper layout plumbing (XLA, not compute): split heads -> (B, H, S, D) ----
    proj = proj.reshape(3, B, S, H, D).transpose(0, 1, 3, 2, 4)   # (3, B, H, S, D)
    qh, kh, vh = proj[0], proj[1], proj[2]

    # ---- kernel 2: attention + output projection, heads on the grid ----
    TQ = _pick_tile(S, 256)
    scale = 1.0 / float(D) ** 0.5
    out = pl.pallas_call(
        partial(_attn_kernel, scale=scale),
        out_shape=jax.ShapeDtypeStruct((B, S, E), query.dtype),
        grid_spec=pltpu.PrefetchScalarGridSpec(
            num_scalar_prefetch=0,
            grid=(B, S // TQ, H),
            in_specs=[
                pl.BlockSpec((1, 1, TQ, D), lambda b, qi, h: (b, h, qi, 0)),  # q tile
                pl.BlockSpec((1, 1, S, D), lambda b, qi, h: (b, h, 0, 0)),    # k (full S)
                pl.BlockSpec((1, 1, S, D), lambda b, qi, h: (b, h, 0, 0)),    # v (full S)
                pl.BlockSpec((1, D, E), lambda b, qi, h: (h, 0, 0)),          # Wo_h slab
                pl.BlockSpec((1, E), lambda b, qi, h: (0, 0)),                # bo
            ],
            out_specs=pl.BlockSpec((1, TQ, E), lambda b, qi, h: (b, qi, 0)),
            scratch_shapes=[pltpu.VMEM((TQ, E), jnp.float32)],
        ),
        compiler_params=pltpu.CompilerParams(
            dimension_semantics=("parallel", "parallel", "arbitrary")),
    )(qh, kh, vh, wo_ht, bo_f32)
    return out


def reference_mha(query, key, value, params, num_heads):
    """Plain-JAX f32 reference mirroring nn.MultiheadAttention (eval, no mask)."""
    B, S, E = query.shape
    wq, wk, wv, wo, bq, bk, bv, bo = params
    D = E // num_heads
    qp = query @ wq.T + bq[0]
    kp = key @ wk.T + bk[0]
    vp = value @ wv.T + bv[0]

    def split(x):  # (B,S,E) -> (B,H,S,D)
        return x.reshape(B, S, num_heads, D).transpose(0, 2, 1, 3)

    qh, kh, vh = split(qp), split(kp), split(vp)
    scores = jnp.einsum('bhqd,bhkd->bhqk', qh, kh) / jnp.sqrt(jnp.float32(D))
    p = jax.nn.softmax(scores, axis=-1)
    ctx = jnp.einsum('bhqk,bhkd->bhqd', p, vh)
    ctx = ctx.transpose(0, 2, 1, 3).reshape(B, S, E)
    return ctx @ wo.T + bo[0]


if __name__ == "__main__":
    B, S, E, H = 2, 8, 32, 4

    key0 = jax.random.PRNGKey(0)
    keys = jax.random.split(key0, 12)

    # nn.MultiheadAttention shapes: in_proj_weight (3E, E) split into wq/wk/wv,
    # out_proj.weight (E, E), biases (E,).
    wq = 0.1 * jax.random.normal(keys[0], (E, E), jnp.float32)
    wk = 0.1 * jax.random.normal(keys[1], (E, E), jnp.float32)
    wv = 0.1 * jax.random.normal(keys[2], (E, E), jnp.float32)
    wo = 0.1 * jax.random.normal(keys[3], (E, E), jnp.float32)
    bq = 0.1 * jax.random.normal(keys[4], (1, E), jnp.float32)
    bk = 0.1 * jax.random.normal(keys[5], (1, E), jnp.float32)
    bv = 0.1 * jax.random.normal(keys[6], (1, E), jnp.float32)
    bo = 0.1 * jax.random.normal(keys[7], (1, E), jnp.float32)
    params = (wq, wk, wv, wo, bq, bk, bv, bo)

    query = jax.random.normal(keys[8], (B, S, E), jnp.float32)
    key_in = jax.random.normal(keys[9], (B, S, E), jnp.float32)
    value = jax.random.normal(keys[10], (B, S, E), jnp.float32)

    out = multi_head_attention(query, key_in, value, params, num_heads=H)
    out = jax.block_until_ready(out)

    ref = reference_mha(query, key_in, value, params, num_heads=H)
    assert out.shape == (B, S, E)
    # bf16 matmuls with f32 accumulation vs f32 reference.
    assert jnp.allclose(out, ref, rtol=2e-2, atol=2e-2), "mismatch vs reference"

    print("KERNEL_OK")
</pallas_src>

<mosaic_0001>
module attributes {stable_mosaic.version = 11 : i64} {
  func.func @_proj_kernel(%arg0: i32, %arg1: i32, %arg2: i32, %arg3: memref<1x1x8x32xbf16, #tpu.memory_space<vmem>>, %arg4: memref<1x32x32xbf16, #tpu.memory_space<vmem>>, %arg5: memref<1x1x32xf32, #tpu.memory_space<vmem>>, %arg6: memref<1x1x8x32xbf16, #tpu.memory_space<vmem>>) attributes {dimension_semantics = [#tpu.dimension_semantics<parallel>, #tpu.dimension_semantics<parallel>, #tpu.dimension_semantics<parallel>], iteration_bounds = array<i64: 3, 2, 1>, scalar_prefetch = 0 : i64, scratch_operands = 0 : i64, tpu.core_type = #tpu.core_type<tc>, window_params = [{transform_indices = @transform_0, window_bounds = array<i64: 1, 1, 8, 32>}, {transform_indices = @transform_1, window_bounds = array<i64: 1, 32, 32>}, {transform_indices = @transform_2, window_bounds = array<i64: 1, 1, 32>}, {transform_indices = @transform_3, window_bounds = array<i64: 1, 1, 8, 32>}]} {
    %c0 = arith.constant 0 : index
    %c0_0 = arith.constant 0 : index
    %c0_1 = arith.constant 0 : index
    %c0_2 = arith.constant 0 : index
    %0 = vector.load %arg3[%c0, %c0_0, %c0_1, %c0_2] : memref<1x1x8x32xbf16, #tpu.memory_space<vmem>>, vector<1x1x8x32xbf16>
    %1 = vector.shape_cast %0 : vector<1x1x8x32xbf16> to vector<8x32xbf16>
    %c0_3 = arith.constant 0 : index
    %c0_4 = arith.constant 0 : index
    %c0_5 = arith.constant 0 : index
    %2 = vector.load %arg4[%c0_3, %c0_4, %c0_5] : memref<1x32x32xbf16, #tpu.memory_space<vmem>>, vector<1x32x32xbf16>
    %3 = vector.shape_cast %2 : vector<1x32x32xbf16> to vector<32x32xbf16>
    %cst = arith.constant dense<0.000000e+00> : vector<8x32xf32>
    %4 = tpu.matmul %1, %3, %cst {dimension_numbers = #tpu.dot_dimension_numbers<[1], [0], [0], [1], [0, 0, 1, 1], [], []>} : vector<8x32xbf16>, vector<32x32xbf16>, vector<8x32xf32> -> vector<8x32xf32>
    %c0_6 = arith.constant 0 : index
    %c0_7 = arith.constant 0 : index
    %c0_8 = arith.constant 0 : index
    %5 = vector.load %arg5[%c0_6, %c0_7, %c0_8] : memref<1x1x32xf32, #tpu.memory_space<vmem>>, vector<1x1x32xf32>
    %6 = vector.shape_cast %5 : vector<1x1x32xf32> to vector<1x32xf32>
    %7 = vector.broadcast %6 : vector<1x32xf32> to vector<8x32xf32>
    %8 = arith.addf %4, %7 : vector<8x32xf32>
    %9 = arith.truncf %8 : vector<8x32xf32> to vector<8x32xbf16>
    %c0_9 = arith.constant 0 : index
    %c0_10 = arith.constant 0 : index
    %c0_11 = arith.constant 0 : index
    %c0_12 = arith.constant 0 : index
    %10 = vector.load %arg6[%c0_9, %c0_10, %c0_11, %c0_12] : memref<1x1x8x32xbf16, #tpu.memory_space<vmem>>, vector<1x1x8x32xbf16>
    %11 = vector.shape_cast %10 : vector<1x1x8x32xbf16> to vector<8x32xbf16>
    %12 = vector.shape_cast %9 : vector<8x32xbf16> to vector<1x1x8x32xbf16>
    tpu.vector_store %arg6[%c0_9, %c0_10, %c0_11, %c0_12], %12 {strides = array<i32>} : memref<1x1x8x32xbf16, #tpu.memory_space<vmem>>, vector<1x1x8x32xbf16>,
    return
  }
  func.func @transform_0(%arg0: i32, %arg1: i32, %arg2: i32) -> (i32, i32, i32, i32) {
    %c0_i32 = arith.constant 0 : i32
    %c0_i32_0 = arith.constant 0 : i32
    return %arg0, %arg1, %arg2, %c0_i32 : i32, i32, i32, i32
  }
  func.func @transform_1(%arg0: i32, %arg1: i32, %arg2: i32) -> (i32, i32, i32) {
    %c0_i32 = arith.constant 0 : i32
    %c0_i32_0 = arith.constant 0 : i32
    %c0_i32_1 = arith.constant 0 : i32
    return %arg0, %c0_i32, %c0_i32_0 : i32, i32, i32
  }
  func.func @transform_2(%arg0: i32, %arg1: i32, %arg2: i32) -> (i32, i32, i32) {
    %c0_i32 = arith.constant 0 : i32
    %c0_i32_0 = arith.constant 0 : i32
    %c0_i32_1 = arith.constant 0 : i32
    return %arg0, %c0_i32, %c0_i32_0 : i32, i32, i32
  }
  func.func @transform_3(%arg0: i32, %arg1: i32, %arg2: i32) -> (i32, i32, i32, i32) {
    %c0_i32 = arith.constant 0 : i32
    %c0_i32_0 = arith.constant 0 : i32
    return %arg0, %arg1, %arg2, %c0_i32 : i32, i32, i32, i32
  }
}

</mosaic_0001>

<llo_original>
// kernel: tpu_custom_call.1
$region0: #{tpu_custom_call.1}
  #allocation0 [shape = 'u32[]', space=smem, size = 0x4, offset = 0x4, fixed_abs, tag = 'smem constant byte address 0x4 - core index']
  #allocation1 [shape = 'u32[144,128]{1,0:T(1,128)}', space=vmem, size = 0x12000, scoped, tag = 'internal scratch']
  %s0 = inlined_call_operand.hbm [shape: bf16[3,2,8,32], index: 0, kind: input, shape index: {}]
  %s1 = inlined_call_operand.hbm [shape: bf16[3,32,32], index: 1, kind: input, shape index: {}]
  %s2 = inlined_call_operand.vmem [shape: f32[3,1,32], index: 2, kind: input, shape index: {}]
  %s3 = inlined_call_operand.hbm [shape: bf16[3,2,8,32], index: 3, kind: output, shape index: {}]
  %s4 = sld [smem:[#allocation0]]
  $region53: #{tpu_custom_call.1} parent=0
    _
  %s6 = ssub.s32 1, %s4
  %s7 = scalar_select 0, %s6, %s4
  $region1: #{tpu_custom_call.1} parent=0
    #allocation2 [shape = 'u8[4096]{0}', space=vmem, size = 0x1000, scoped, tag = 'input window, operand 0']
    #allocation3 [shape = 's32[2]{0}', space=sflag, size = 0x8, scoped, tag = 'scoped memory for tpu_custom_call.1']
    #allocation4 [shape = 's32[2]{0}', space=sflag, size = 0x8, scoped, tag = 'scoped memory for tpu_custom_call.1']
    #allocation5 [shape = 'u8[16384]{0}', space=vmem, size = 0x4000, scoped, tag = 'input window, operand 1']
    #allocation6 [shape = 's32[2]{0}', space=sflag, size = 0x8, scoped, tag = 'scoped memory for tpu_custom_call.1']
    #allocation7 [shape = 'u8[4096]{0}', space=vmem, size = 0x1000, scoped, tag = 'output window, operand 0']
    %8 = vsyncpa [#allocation3], 0
    %s9 = scalar_lea.sflag [#allocation3], 1
    %10 = vsyncpa %s9, 0
    %11 = vsyncpa [#allocation6], 0
    %s12 = scalar_lea.sflag [#allocation6], 1
    %13 = vsyncpa %s12, 0
    %14 = vsyncpa [#allocation4], 0
    %s15 = scalar_lea.sflag [#allocation4], 1
    %16 = vsyncpa %s15, 0
    loop: start=0, step=1, limit=8
    $region2: #{tpu_custom_call.1} parent=1 // loop_pre_header
      _
    $region3: #{tpu_custom_call.1} parent=1 // loop_header
      %s18 = sphi 0, %s22
      %p19 = scmp.ge.s32.totalorder %s18, 8
      %s25 = sphi 0, %s44
      %s26 = sphi 0, %s40
      %s27 = sphi 0, %s36
      %s28 = sphi 0, %s25
      %s29 = sphi 0, %s26
      %s30 = sphi 0, %s27
      %s31 = sphi 0, %s28
      %s32 = sphi 0, %s29
      %s33 = sphi 0, %s30
      %s51 = sphi 0, %s53
      %s54 = sphi 0, %s51
      %s55 = sphi 0, %s54
      %s71 = sphi 0, %s55
      %s77 = sphi 0, %s79
      %s80 = sphi 0, %s77
      %s81 = sphi 0, %s80
      %s97 = sphi 0, %s81
      %s103 = sphi 0, %s105
      %s106 = sphi 0, %s103
      %s107 = sphi 0, %s106
      %s123 = sphi 0, %s107
      %s133 = sphi 0, %s135
      %s136 = sphi 0, %s133
      %s137 = sphi 0, %s136
      %s153 = sphi 0, %s137
    $region4: #{tpu_custom_call.1} parent=1 // loop_header_branch
      %21 = sbr.rel (%p19) target = $region8
    $region5: #{tpu_custom_call.1} parent=1 // loop_body
      %s23 = ssub.s32 %s18, 1
      %s24 = ssub.s32 %s18, 2
      %s34 = sadd.s32 1, %s27
      %p35 = scmp.ge.s32.totalorder %s34, 1
      %s36 = scalar_select %p35, 0, %s34
      %s37 = sadd.s32 1, %s26
      %s38 = scalar_select %p35, %s37, %s26
      %p39 = scmp.ge.s32.totalorder %s38, 2
      %s40 = scalar_select %p39, 0, %s38
      %s41 = sadd.s32 1, %s25
      %s42 = scalar_select %p39, %s41, %s25
      %p43 = scmp.ge.s32.totalorder %s42, 3
      %s44 = scalar_select %p43, 0, %s42
      %s45 = ssub.s32 %s25, %s44
      %s46 = ssub.s32 %s26, %s40
      %s47 = sor.u32 %s45, %s46
      %s48 = ssub.s32 %s27, %s36
      %s49 = sor.u32 %s47, %s48
      %p50 = scmp.eq.s32.totalorder %s49, 0
      %s52 = sadd.s32 %s51, 1
      %s53 = scalar_select %p50, %s51, %s52
      %p56 = pneg %p50
      %p57 = scmp.eq.s32.totalorder %s18, 5
      %p58 = por %p56, %p57
      %p59 = scmp.ne.s32.totalorder %s51, %s54
      %p60 = scmp.eq.s32.totalorder %s18, 0
      %p61 = por %p59, %p60
      %p62 = scmp.ne.s32.totalorder %s51, %s54
      %p63 = scmp.eq.s32.totalorder %s23, 5
      %p64 = por %p62, %p63
      %p65 = scmp.ne.s32.totalorder %s54, %s55
      %p66 = scmp.eq.s32.totalorder %s23, 0
      %p67 = por %p65, %p66
      %p68 = scmp.ne.s32.totalorder %s54, %s55
      %p69 = scmp.eq.s32.totalorder %s24, 5
      %p70 = por %p68, %p69
      %p72 = scmp.ne.s32.totalorder %s55, %s71
      %p73 = scmp.eq.s32.totalorder %s24, 0
      %p74 = por %p72, %p73
      %s75 = ssub.s32 %s25, %s44
      %p76 = scmp.eq.s32.totalorder %s75, 0
      %s78 = sadd.s32 %s77, 1
      %s79 = scalar_select %p76, %s77, %s78
      %p82 = pneg %p76
      %p83 = scmp.eq.s32.totalorder %s18, 5
      %p84 = por %p82, %p83
      %p85 = scmp.ne.s32.totalorder %s77, %s80
      %p86 = scmp.eq.s32.totalorder %s18, 0
      %p87 = por %p85, %p86
      %p88 = scmp.ne.s32.totalorder %s77, %s80
      %p89 = scmp.eq.s32.totalorder %s23, 5
      %p90 = por %p88, %p89
      %p91 = scmp.ne.s32.totalorder %s80, %s81
      %p92 = scmp.eq.s32.totalorder %s23, 0
      %p93 = por %p91, %p92
      %p94 = scmp.ne.s32.totalorder %s80, %s81
      %p95 = scmp.eq.s32.totalorder %s24, 5
      %p96 = por %p94, %p95
      %p98 = scmp.ne.s32.totalorder %s81, %s97
      %p99 = scmp.eq.s32.totalorder %s24, 0
      %p100 = por %p98, %p99
      %s101 = ssub.s32 %s25, %s44
      %p102 = scmp.eq.s32.totalorder %s101, 0
      %s104 = sadd.s32 %s103, 1
      %s105 = scalar_select %p102, %s103, %s104
      %p108 = pneg %p102
      %p109 = scmp.eq.s32.totalorder %s18, 5
      %p110 = por %p108, %p109
      %p111 = scmp.ne.s32.totalorder %s103, %s106
      %p112 = scmp.eq.s32.totalorder %s18, 0
      %p113 = por %p111, %p112
      %p114 = scmp.ne.s32.totalorder %s103, %s106
      %p115 = scmp.eq.s32.totalorder %s23, 5
      %p116 = por %p114, %p115
      %p117 = scmp.ne.s32.totalorder %s106, %s107
      %p118 = scmp.eq.s32.totalorder %s23, 0
      %p119 = por %p117, %p118
      %p120 = scmp.ne.s32.totalorder %s106, %s107
      %p121 = scmp.eq.s32.totalorder %s24, 5
      %p122 = por %p120, %p121
      %p124 = scmp.ne.s32.totalorder %s107, %s123
      %p125 = scmp.eq.s32.totalorder %s24, 0
      %p126 = por %p124, %p125
      %s127 = ssub.s32 %s25, %s44
      %s128 = ssub.s32 %s26, %s40
      %s129 = sor.u32 %s127, %s128
      %s130 = ssub.s32 %s27, %s36
      %s131 = sor.u32 %s129, %s130
      %p132 = scmp.eq.s32.totalorder %s131, 0
      %s134 = sadd.s32 %s133, 1
      %s135 = scalar_select %p132, %s133, %s134
      %p138 = pneg %p132
      %p139 = scmp.eq.s32.totalorder %s18, 5
      %p140 = por %p138, %p139
      %p141 = scmp.ne.s32.totalorder %s133, %s136
      %p142 = scmp.eq.s32.totalorder %s18, 0
      %p143 = por %p141, %p142
      %p144 = scmp.ne.s32.totalorder %s133, %s136
      %p145 = scmp.eq.s32.totalorder %s23, 5
      %p146 = por %p144, %p145
      %p147 = scmp.ne.s32.totalorder %s136, %s137
      %p148 = scmp.eq.s32.totalorder %s23, 0
      %p149 = por %p147, %p148
      %p150 = scmp.ne.s32.totalorder %s136, %s137
      %p151 = scmp.eq.s32.totalorder %s24, 5
      %p152 = por %p150, %p151
      %p154 = scmp.ne.s32.totalorder %s137, %s153
      %p155 = scmp.eq.s32.totalorder %s24, 0
      %p156 = por %p154, %p155
      %p157 = scmp.le.s32.totalorder 1, %s18
      %p158 = scmp.lt.s32.totalorder %s18, 7
      %p159 = pnand %p157, %p158
      %p160 = pneg %p159
      // Predicated region
      $region9: #{tpu_custom_call.1} parent=5 // pred_check
        _
      $region10: #{tpu_custom_call.1} parent=5 // pred_check_branch
        %162 = sbr.rel (%p159) target = $region12
      $region11: #{tpu_custom_call.1} parent=5 // pred_region
        %s163 = ssub.s32 %s18, 1
      $region12: #{tpu_custom_call.1} parent=5 // pred_fallthru
        _
      %p164 = scmp.lt.s32.totalorder %s18, 6
      // Predicated region
      $region13: #{tpu_custom_call.1} parent=5 // pred_check
        %p165 = pneg %p164
      $region14: #{tpu_custom_call.1} parent=5 // pred_check_branch
        %167 = sbr.rel (%p165) target = $region16
      $region15: #{tpu_custom_call.1} parent=5 // pred_region
        // Predicated region
        $region17: #{tpu_custom_call.1} parent=15 // pred_check
          %p168 = pneg %p61
        $region18: #{tpu_custom_call.1} parent=15 // pred_check_branch
          %170 = sbr.rel (%p168) target = $region20
        $region19: #{tpu_custom_call.1} parent=15 // pred_region
          %s171 = sand.u32 %s51, 1
          %s172 = scalar_lea.sflag [#allocation3], %s171
          %s173 = sand.u32 %s51, 1
          %s174 = smul.addr %s173, 4
          %s175 = scalar_lea.vmem [#allocation2], %s174
          %s177 = ssub.s32 64, 64
          %178 = vsyncadd %s172, %s177
          %s179 = sadd.s32 %s27, %s26
          %s180 = smul.addr %s25, 2
          %s181 = sadd.s32 %s179, %s180
          %s182 = smul.addr %s181, 64
          %s183 = scalar_lea.hbm %s0, %s182
          %s185 = sshll.u32 %s175, 4
          %s186 = int_to_ptr.vmem [resolvable:$true] %s185
          %188 = dma.hbm_to_vmem [thread:$0]  %s183, 64, %s186, %s172
        $region20: #{tpu_custom_call.1} parent=15 // pred_fallthru
          _
        // Predicated region
        $region21: #{tpu_custom_call.1} parent=15 // pred_check
          %p189 = pneg %p87
        $region22: #{tpu_custom_call.1} parent=15 // pred_check_branch
          %191 = sbr.rel (%p189) target = $region24
        $region23: #{tpu_custom_call.1} parent=15 // pred_region
          %s192 = sand.u32 %s77, 1
          %s193 = scalar_lea.sflag [#allocation6], %s192
          %s194 = sand.u32 %s77, 1
          %s195 = smul.addr %s194, 16
          %s196 = scalar_lea.vmem [#allocation5], %s195
          %s198 = ssub.s32 256, 256
          %199 = vsyncadd %s193, %s198
          %s200 = smul.addr %s25, 4
          %s201 = smul.addr %s200, 64
          %s202 = scalar_lea.hbm %s1, %s201
          %s203 = sshll.u32 %s196, 4
          %s204 = int_to_ptr.vmem [resolvable:$true] %s203
          %209 = dma.hbm_to_vmem [thread:$0]  %s202, 256, %s204, %s193, 64, 64, 4
        $region24: #{tpu_custom_call.1} parent=15 // pred_fallthru
          _
        // Predicated region
        $region25: #{tpu_custom_call.1} parent=15 // pred_check
          %p210 = pneg %p113
        $region26: #{tpu_custom_call.1} parent=15 // pred_check_branch
          %212 = sbr.rel (%p210) target = $region28
        $region27: #{tpu_custom_call.1} parent=15 // pred_region
          %p213 = scmp.lt.s32.totalorder %s25, 2
          %s214 = scalar_select %p213, %s25, 2
          %s215 = scalar_lea.vmem %s2, %s214
        $region28: #{tpu_custom_call.1} parent=15 // pred_fallthru
          _
      $region16: #{tpu_custom_call.1} parent=5 // pred_fallthru
        _
      %p216 = scmp.le.s32.totalorder 1, %s18
      %p217 = scmp.lt.s32.totalorder %s18, 7
      %p218 = pnand %p216, %p217
      %p219 = pneg %p218
      // Predicated region
      $region29: #{tpu_custom_call.1} parent=5 // pred_check
        _
      $region30: #{tpu_custom_call.1} parent=5 // pred_check_branch
        %221 = sbr.rel (%p218) target = $region32
      $region31: #{tpu_custom_call.1} parent=5 // pred_region
        %s222 = ssub.s32 %s18, 1
        %s223 = sand.u32 %s54, 1
        %s224 = scalar_lea.sflag [#allocation3], %s223
        %s225 = sand.u32 %s54, 1
        %s226 = smul.addr %s225, 4
        %s227 = scalar_lea.vmem [#allocation2], %s226
        // Predicated region
        $region33: #{tpu_custom_call.1} parent=31 // pred_check
          %p228 = pneg %p67
        $region34: #{tpu_custom_call.1} parent=31 // pred_check_branch
          %230 = sbr.rel (%p228) target = $region36
        $region35: #{tpu_custom_call.1} parent=31 // pred_region
          %231 = dma.done %s224, 64
        $region36: #{tpu_custom_call.1} parent=31 // pred_fallthru
          _
        %s232 = sand.u32 %s80, 1
        %s233 = scalar_lea.sflag [#allocation6], %s232
        %s234 = sand.u32 %s80, 1
        %s235 = smul.addr %s234, 16
        %s236 = scalar_lea.vmem [#allocation5], %s235
        // Predicated region
        $region37: #{tpu_custom_call.1} parent=31 // pred_check
          %p237 = pneg %p93
        $region38: #{tpu_custom_call.1} parent=31 // pred_check_branch
          %239 = sbr.rel (%p237) target = $region40
        $region39: #{tpu_custom_call.1} parent=31 // pred_region
          %240 = dma.done %s233, 256
        $region40: #{tpu_custom_call.1} parent=31 // pred_fallthru
          _
        %s241 = sand.u32 %s54, 1
        %s242 = scalar_lea.sflag [#allocation3], %s241
        %s243 = sand.u32 %s54, 1
        %s244 = smul.addr %s243, 4
        %s245 = scalar_lea.vmem [#allocation2], %s244
        %p246 = pneg %p67
        %p247 = pneg %p64
        %s248 = sand.u32 %s80, 1
        %s249 = scalar_lea.sflag [#allocation6], %s248
        %s250 = sand.u32 %s80, 1
        %s251 = smul.addr %s250, 16
        %s252 = scalar_lea.vmem [#allocation5], %s251
        %p253 = pneg %p93
        %p254 = pneg %p90
        %p255 = scmp.lt.s32.totalorder %s28, 2
        %s256 = scalar_select %p255, %s28, 2
        %s257 = scalar_lea.vmem %s2, %s256
        %p258 = pneg %p119
        %p259 = pneg %p116
        %p260 = pneg %p149
        %p261 = pneg %p146
        %s262 = sand.u32 %s136, 1
        %s263 = scalar_lea.sflag [#allocation4], %s262
        %s264 = sand.u32 %s136, 1
        %s265 = smul.addr %s264, 4
        %s266 = scalar_lea.vmem [#allocation7], %s265
        %p267 = scmp.lt.s32.totalorder %s28, 2
        %s268 = scalar_select %p267, %s28, 2
        %s269 = scalar_lea.vmem %s2, %s268
        %v271 = vld [vmem:[%s227] sm:$0xf]
        %v272 = vld [vmem:[%s236] sm:$0xf]
        %v273 = vld [vmem:[%s236 + $0x4] sm:$0xf]
        %v274 = vld [vmem:[%s236 + $0x8] sm:$0xf]
        %v275 = vld [vmem:[%s236 + $0xc] sm:$0xf]
        %v276 = vld [vmem:[%s269] sm:$0x1]
        %v278 = vlaneseq
        %v279 = vshrl.u32 %v278, 7
        %v280 = vsub.s32 0, %v279
        %v281 = vrot.slane %v276, %v280
        %v287 = vunpack.c.l.b16 %v272
        %v288 = vunpack.c.l.b16 %v273
        %v289 = vunpack.c.l.b16 %v274
        %v290 = vunpack.c.l.b16 %v275
        %v291 = vpack.c.b16 %v288, %v287
        %v292 = vpack.c.b16 %v290, %v289
        %vm295 = vcmask 261120
        %v297 = vsel %vm295, %v271, 0
        %299 = vmatprep.subr.bf16.mxu0 0
        %300 = vmatpush1.bf16.msra.mxu0 0
        %301 = vmatprep.subr.bf16.mxu0 0
        %302 = vmatpush1.bf16.msra.mxu0 0
        %303 = vmatprep.subr.bf16.mxu0 0
        %304 = vmatpush1.bf16.msra.mxu0 0
        %305 = vmatprep.subr.bf16.mxu0 0
        %306 = vmatpush1.bf16.msra.mxu0 0
        %307 = vmatprep.subr.bf16.mxu0 0
        %308 = vmatpush1.bf16.msra.mxu0 0
        %309 = vmatprep.subr.bf16.mxu0 0
        %310 = vmatpush1.bf16.msra.mxu0 0
        %311 = vmatprep.subr.bf16.mxu0 0
        %312 = vmatpush1.bf16.msra.mxu0 %v292
        %313 = vmatprep.subr.bf16.mxu0 0
        %314 = vmatpush1.bf16.msra.mxu0 %v291
        %315 = vmatprep.subr.bf16.mxu0 0
        %316 = vmatpush2.bf16.msra.mxu0 0
        %317 = vmatprep.subr.bf16.mxu0 0
        %318 = vmatpush2.bf16.msra.mxu0 0
        %319 = vmatprep.subr.bf16.mxu0 0
        %320 = vmatpush2.bf16.msra.mxu0 0
        %321 = vmatprep.subr.bf16.mxu0 0
        %322 = vmatpush2.bf16.msra.mxu0 0
        %323 = vmatprep.subr.bf16.mxu0 0
        %324 = vmatpush2.bf16.msra.mxu0 0
        %325 = vmatprep.subr.bf16.mxu0 0
        %326 = vmatpush2.bf16.msra.mxu0 0
        %327 = vmatprep.subr.bf16.mxu0 0
        %328 = vmatpush2.bf16.msra.mxu0 0
        %329 = vmatprep.subr.bf16.mxu0 0
        %330 = vmatpush2.bf16.msra.mxu0 0
        %331 = vmatprep.mubr.bf16.mxu0 0
        %332 = vmatmul.mubr.bf16.gmra.mxu0 %v297
        %v333 = vpop.f32.mrf.mxu0
        %v334 = vadd.f32 %v281, %v333
        %v335 = vpop.f32.mrf.mxu0
        %v336 = vpop.f32.mrf.mxu0
        %v337 = vpop.f32.mrf.mxu0
        %338 = vdwg.mxu0
        %v339 = vpack.c.bf16 %v334, %v334
        %vm340 = vcmask 257024
        %341 = vst.msk [vmem:[%s266] sm:$0xf] %vm340, %v339
        %s342 = sand.u32 %s136, 1
        %s343 = scalar_lea.sflag [#allocation4], %s342
        %s344 = sand.u32 %s136, 1
        %s345 = smul.addr %s344, 4
        %s346 = scalar_lea.vmem [#allocation7], %s345
        // Predicated region
        $region41: #{tpu_custom_call.1} parent=31 // pred_check
          %p347 = pneg %p146
        $region42: #{tpu_custom_call.1} parent=31 // pred_check_branch
          %349 = sbr.rel (%p347) target = $region44
        $region43: #{tpu_custom_call.1} parent=31 // pred_region
          %s351 = ssub.s32 64, 64
          %352 = vsyncadd %s343, %s351
          %s353 = sadd.s32 %s30, %s29
          %s354 = smul.addr %s28, 2
          %s355 = sadd.s32 %s353, %s354
          %s356 = smul.addr %s355, 64
          %s357 = scalar_lea.hbm %s3, %s356
          %s359 = sshll.u32 %s346, 4
          %s360 = int_to_ptr.vmem [resolvable:$true] %s359
          %362 = dma.vmem_to_hbm [thread:$0]  %s360, 64, %s357, %s343
        $region44: #{tpu_custom_call.1} parent=31 // pred_fallthru
          _
      $region32: #{tpu_custom_call.1} parent=5 // pred_fallthru
        _
      %p363 = scmp.le.s32.totalorder 2, %s18
      // Predicated region
      $region45: #{tpu_custom_call.1} parent=5 // pred_check
        %p364 = pneg %p363
      $region46: #{tpu_custom_call.1} parent=5 // pred_check_branch
        %366 = sbr.rel (%p364) target = $region48
      $region47: #{tpu_custom_call.1} parent=5 // pred_region
        %s367 = ssub.s32 %s18, 2
        // Predicated region
        $region49: #{tpu_custom_call.1} parent=47 // pred_check
          %p368 = pneg %p152
        $region50: #{tpu_custom_call.1} parent=47 // pred_check_branch
          %370 = sbr.rel (%p368) target = $region52
        $region51: #{tpu_custom_call.1} parent=47 // pred_region
          %s371 = sand.u32 %s137, 1
          %s372 = scalar_lea.sflag [#allocation4], %s371
          %s373 = sand.u32 %s137, 1
          %s374 = smul.addr %s373, 4
          %s375 = scalar_lea.vmem [#allocation7], %s374
          %376 = dma.done %s372, 64
        $region52: #{tpu_custom_call.1} parent=47 // pred_fallthru
          _
      $region48: #{tpu_custom_call.1} parent=5 // pred_fallthru
        _
    $region6: #{tpu_custom_call.1} parent=1 // loop_footer
      %s22 = sadd.s32 1, %s18
    $region7: #{tpu_custom_call.1} parent=1 // loop_footer_branch
      %17 = sbr.rel target = $region3
    $region8: #{tpu_custom_call.1} parent=1 // loop_exit
      _
    %377 = vsyncpa [#allocation3], 1
    %s378 = scalar_lea.sflag [#allocation3], 1
    %379 = vsyncpa %s378, 1
    %380 = vsyncpa [#allocation6], 1
    %s381 = scalar_lea.sflag [#allocation6], 1
    %382 = vsyncpa %s381, 1
    %383 = vsyncpa [#allocation4], 1
    %s384 = scalar_lea.sflag [#allocation4], 1
    %385 = vsyncpa %s384, 1

</llo_original>
